<compile_context>
chip_gen: v7x
topology: tpu7x:2x2x1
jax: 0.10.0
libtpu: 0.0.40
codegen_flags: <defaults>
</compile_context>

<pallas_src>
import functools

import jax
import jax.numpy as jnp
from jax.experimental import pallas as pl
from jax.experimental.pallas import tpu as pltpu


def _affine_kernel(x_ref, a_ref, b_ref, o_ref):
    # x_ref: (tm, D)   a_ref: (D, D)   b_ref: (1, D) f32   o_ref: (tm, D)
    lhs = x_ref[...].astype(a_ref.dtype)     # in-VMEM cast (VPU), no HBM cost
    acc = jnp.dot(lhs, a_ref[...], preferred_element_type=jnp.float32)
    o_ref[...] = (acc + b_ref[...]).astype(o_ref.dtype)   # bias bcast over rows


def _round_up(x, m):
    return ((x + m - 1) // m) * m


def _const_spec(shape):
    """BlockSpec for a grid-invariant operand; single-buffered if supported."""
    index_map = lambda i: (0,) * len(shape)
    try:
        return pl.BlockSpec(shape, index_map, pipeline_mode=pl.Buffered(1))
    except (TypeError, AttributeError):
        # Older jax without pipeline_mode / Buffered: fall back to default.
        return pl.BlockSpec(shape, index_map)


def _vmem_budget_bytes():
    """~Half of physical VMEM (generation aware), capped at 64 MiB."""
    try:
        cap = int(pltpu.get_tpu_info().vmem_capacity_bytes)
    except Exception:
        cap = 64 * 1024 * 1024   # conservative: v7x has 64 MiB per TensorCore
    return max(16 * 1024 * 1024, min(cap // 2, 64 * 1024 * 1024))


def _pick_tm(M, D, x_itemsize, out_itemsize, a_resident_bytes,
             tile_budget_bytes, max_tm=1024):
    """Largest row tile s.t. resident A + double-buffered x/y tiles fit."""
    min_rows = max(8, 32 // int(x_itemsize))       # 8 f32, 16 bf16, 32 int8
    bytes_per_row = 2 * D * int(x_itemsize) + 2 * D * int(out_itemsize)
    avail = max(tile_budget_bytes - int(a_resident_bytes),
                bytes_per_row * min_rows)
    tm = min(max_tm, avail // bytes_per_row)
    align = 128 if tm >= 128 else min_rows         # 128 is enough on all gens
    tm = max(min_rows, (tm // align) * align)
    if tm >= M:
        return int(M)                              # single full-array block
    # Nudge the grid to an even step count so v7x's two TensorCores get a
    # balanced split of the "parallel" row axis (costs at most one extra
    # ~0.35us grid step; negligible on single-TC chips).
    grid_m = pl.cdiv(M, tm)
    if grid_m > 1 and grid_m % 2 == 1:
        tm = min(tm, _round_up(pl.cdiv(M, grid_m + 1), align))
    return int(tm)


@functools.partial(jax.jit, static_argnames=("use_bf16_operands", "out_dtype"))
def affine_forward(x, A, b, *, use_bf16_operands=True, out_dtype=None):
    """y = reshape(reshape(x, (-1, D)) @ A + b, (B, S, D))"""
    B, S, D = x.shape
    assert A.shape == (D, D) and b.shape == (D,)
    out_dtype = jnp.dtype(x.dtype if out_dtype is None else out_dtype)

    if use_bf16_operands:
        # bf16 MXU operands, f32 accumulation: single-pass MXU on v6e/v7x and
        # no f32 emulation.  Only A is cast here; x is cast per-tile in-kernel.
        A = A.astype(jnp.bfloat16)

    # Lane-align the feature dim so output stores are full-width (no vst.msk).
    D_pad = max(128, _round_up(D, 128))
    if D_pad != D:
        x = jnp.pad(x, ((0, 0), (0, 0), (0, D_pad - D)))
        A = jnp.pad(A, ((0, D_pad - D), (0, D_pad - D)))
        b = jnp.pad(b, ((0, D_pad - D),))

    M = B * S
    x2d = x.reshape(M, D_pad)
    b2d = b.reshape(1, D_pad).astype(jnp.float32)

    vmem_limit = _vmem_budget_bytes()
    a_resident = D_pad * D_pad * A.dtype.itemsize + 8 * D_pad * 4  # A + bias row
    tm = _pick_tm(M, D_pad, x2d.dtype.itemsize, out_dtype.itemsize,
                  a_resident, int(vmem_limit * 0.85))
    grid_m = pl.cdiv(M, tm)      # ragged last block handled by Pallas masking

    cost = pl.CostEstimate(
        flops=2 * M * D_pad * D_pad,
        transcendentals=0,
        bytes_accessed=(M * D_pad * x2d.dtype.itemsize            # x read
                        + D_pad * D_pad * A.dtype.itemsize        # A read
                        + D_pad * 4                               # b read
                        + M * D_pad * out_dtype.itemsize),        # y write
    )

    y2d = pl.pallas_call(
        _affine_kernel,
        out_shape=jax.ShapeDtypeStruct((M, D_pad), out_dtype),
        grid_spec=pltpu.PrefetchScalarGridSpec(
            num_scalar_prefetch=0,
            grid=(grid_m,),
            in_specs=[
                pl.BlockSpec((tm, D_pad), lambda i: (i, 0)),  # x tile (pipelined)
                _const_spec((D_pad, D_pad)),                  # A resident, 1 buf
                _const_spec((1, D_pad)),                      # bias row, 1 buf
            ],
            out_specs=pl.BlockSpec((tm, D_pad), lambda i: (i, 0)),
        ),
        compiler_params=pltpu.CompilerParams(
            dimension_semantics=("parallel",),   # row tiles shard across TCs
            vmem_limit_bytes=int(vmem_limit),
        ),
        cost_estimate=cost,
    )(x2d, A, b2d)

    y = y2d.reshape(B, S, D_pad)
    if D_pad != D:
        y = y[..., :D]
    return y


if __name__ == "__main__":
    key = jax.random.PRNGKey(0)
    kx, ka, kb = jax.random.split(key, 3)

    # Small, lane-aligned demo shape (hidden = 128).
    B, S, D = 2, 8, 128
    x = jax.random.normal(kx, (B, S, D), dtype=jnp.float32)
    # The module registers zero buffers; fill them deterministically so the
    # kernel computes something non-trivial (shapes follow __init__).
    A = jax.random.normal(ka, (D, D), dtype=jnp.float32) * 0.02
    b = jax.random.normal(kb, (D,), dtype=jnp.float32) * 0.02

    y_ref = (x.reshape(-1, D) @ A + b).reshape(B, S, D)

    # Default path: bf16 operands, f32 accumulation (looser tolerance).
    y = jax.block_until_ready(affine_forward(x, A, b))
    assert y.shape == (B, S, D) and y.dtype == x.dtype
    assert jnp.allclose(y, y_ref, atol=2e-2, rtol=2e-2)

    # Exact f32 parity with the PyTorch module.
    y32 = jax.block_until_ready(affine_forward(x, A, b, use_bf16_operands=False))
    assert jnp.allclose(y32, y_ref, atol=1e-5, rtol=1e-5)

    # Ragged row count at real CLIP token count (M = 2*577 = 1154 > tm):
    # exercises the no-pad / masked last-block path (grid = 2, partial block).
    S2 = 577
    x2 = jax.random.normal(kx, (B, S2, D), dtype=jnp.float32)
    y2 = jax.block_until_ready(affine_forward(x2, A, b, use_bf16_operands=False))
    y2_ref = (x2.reshape(-1, D) @ A + b).reshape(B, S2, D)
    assert jnp.allclose(y2, y2_ref, atol=1e-5, rtol=1e-5)

    # Sub-lane-width feature dim (D=32) goes through the pad-to-128 path.
    D3 = 32
    x3 = jax.random.normal(kx, (B, S, D3), dtype=jnp.float32)
    A3 = jax.random.normal(ka, (D3, D3), dtype=jnp.float32) * 0.02
    b3 = jax.random.normal(kb, (D3,), dtype=jnp.float32) * 0.02
    y3 = jax.block_until_ready(affine_forward(x3, A3, b3, use_bf16_operands=False))
    y3_ref = (x3.reshape(-1, D3) @ A3 + b3).reshape(B, S, D3)
    assert jnp.allclose(y3, y3_ref, atol=1e-5, rtol=1e-5)

    # Optional bf16 output dtype (cuts the y-write HBM term for bf16 consumers).
    y_bf16 = jax.block_until_ready(affine_forward(x, A, b, out_dtype=jnp.bfloat16))
    assert y_bf16.dtype == jnp.bfloat16
    assert jnp.allclose(y_bf16.astype(jnp.float32), y_ref, atol=3e-2, rtol=3e-2)

    print("KERNEL_OK")
</pallas_src>

<mosaic_0001>
module attributes {stable_mosaic.version = 11 : i64} {
  func.func @_affine_kernel(%arg0: i32, %arg1: memref<16x128xf32, #tpu.memory_space<vmem>>, %arg2: memref<128x128xbf16, #tpu.memory_space<vmem>>, %arg3: memref<1x128xf32, #tpu.memory_space<vmem>>, %arg4: memref<16x128xf32, #tpu.memory_space<vmem>>) attributes {dimension_semantics = [#tpu.dimension_semantics<parallel>], iteration_bounds = array<i64: 1>, scalar_prefetch = 0 : i64, scratch_operands = 0 : i64, tpu.core_type = #tpu.core_type<tc>, window_params = [{transform_indices = @transform_0, window_bounds = array<i64: 16, 128>}, {pipeline_mode = #tpu.pipeline_mode<synchronous>, transform_indices = @transform_1, window_bounds = array<i64: 128, 128>}, {pipeline_mode = #tpu.pipeline_mode<synchronous>, transform_indices = @transform_2, window_bounds = array<i64: 1, 128>}, {transform_indices = @transform_3, window_bounds = array<i64: 16, 128>}]} {
    %c0 = arith.constant 0 : index
    %c0_0 = arith.constant 0 : index
    %0 = vector.load %arg1[%c0, %c0_0] : memref<16x128xf32, #tpu.memory_space<vmem>>, vector<16x128xf32>
    %1 = arith.truncf %0 : vector<16x128xf32> to vector<16x128xbf16>
    %c0_1 = arith.constant 0 : index
    %c0_2 = arith.constant 0 : index
    %2 = vector.load %arg2[%c0_1, %c0_2] : memref<128x128xbf16, #tpu.memory_space<vmem>>, vector<128x128xbf16>
    %cst = arith.constant dense<0.000000e+00> : vector<16x128xf32>
    %3 = tpu.matmul %1, %2, %cst {dimension_numbers = #tpu.dot_dimension_numbers<[1], [0], [0], [1], [0, 0, 1, 1], [], []>} : vector<16x128xbf16>, vector<128x128xbf16>, vector<16x128xf32> -> vector<16x128xf32>
    %c0_3 = arith.constant 0 : index
    %c0_4 = arith.constant 0 : index
    %4 = vector.load %arg3[%c0_3, %c0_4] : memref<1x128xf32, #tpu.memory_space<vmem>>, vector<1x128xf32>
    %5 = vector.broadcast %4 : vector<1x128xf32> to vector<16x128xf32>
    %6 = arith.addf %3, %5 : vector<16x128xf32>
    %c0_5 = arith.constant 0 : index
    %c0_6 = arith.constant 0 : index
    %7 = vector.load %arg4[%c0_5, %c0_6] : memref<16x128xf32, #tpu.memory_space<vmem>>, vector<16x128xf32>
    tpu.vector_store %arg4[%c0_5, %c0_6], %6 {strides = array<i32>} : memref<16x128xf32, #tpu.memory_space<vmem>>, vector<16x128xf32>,
    return
  }
  func.func @transform_0(%arg0: i32) -> (i32, i32) {
    %c0_i32 = arith.constant 0 : i32
    %c0_i32_0 = arith.constant 0 : i32
    return %arg0, %c0_i32 : i32, i32
  }
  func.func @transform_1(%arg0: i32) -> (i32, i32) {
    %c0_i32 = arith.constant 0 : i32
    %c0_i32_0 = arith.constant 0 : i32
    %c0_i32_1 = arith.constant 0 : i32
    return %c0_i32, %c0_i32_0 : i32, i32
  }
  func.func @transform_2(%arg0: i32) -> (i32, i32) {
    %c0_i32 = arith.constant 0 : i32
    %c0_i32_0 = arith.constant 0 : i32
    %c0_i32_1 = arith.constant 0 : i32
    return %c0_i32, %c0_i32_0 : i32, i32
  }
  func.func @transform_3(%arg0: i32) -> (i32, i32) {
    %c0_i32 = arith.constant 0 : i32
    %c0_i32_0 = arith.constant 0 : i32
    return %arg0, %c0_i32 : i32, i32
  }
}

</mosaic_0001>

<llo_original>
// kernel: affine_forward.1
$region0: #{affine_forward.1}
  #allocation0 [shape = 'u32[]', space=smem, size = 0x4, offset = 0x4, fixed_abs, tag = 'smem constant byte address 0x4 - core index']
  #allocation1 [shape = 'u32[144,128]{1,0:T(1,128)}', space=vmem, size = 0x12000, scoped, tag = 'internal scratch']
  %s0 = inlined_call_operand.vmem [shape: f32[16,128], index: 0, kind: input, shape index: {}]
  %s1 = inlined_call_operand.vmem [shape: bf16[128,128], index: 1, kind: input, shape index: {}]
  %s2 = inlined_call_operand.vmem [shape: f32[1,128], index: 2, kind: input, shape index: {}]
  %s3 = inlined_call_operand.hbm [shape: f32[16,128], index: 3, kind: output, shape index: {}]
  %s4 = sld [smem:[#allocation0]]
  $region22: #{affine_forward.1} parent=0
    _
  %s6 = ssub.s32 1, %s4
  %s7 = scalar_select 0, %s6, %s4
  $region1: #{affine_forward.1} parent=0
    #allocation2 [shape = 'u8[8192]{0}', space=vmem, size = 0x2000, scoped, tag = 'output window, operand 0, single buffered']
    #allocation3 [shape = 's32[1]{0}', space=sflag, size = 0x4, scoped, tag = 'scoped memory for affine_forward.1']
    %8 = vsyncpa [#allocation3], 0
    // Predicated region
    $region2: #{affine_forward.1} parent=1 // pred_check
      _
    $region3: #{affine_forward.1} parent=1 // pred_check_branch
      %10 = sbr.rel (0) target = $region5
    $region4: #{affine_forward.1} parent=1 // pred_region
      _
    $region5: #{affine_forward.1} parent=1 // pred_fallthru
      _
    // Predicated region
    $region6: #{affine_forward.1} parent=1 // pred_check
      _
    $region7: #{affine_forward.1} parent=1 // pred_check_branch
      %12 = sbr.rel (0) target = $region9
    $region8: #{affine_forward.1} parent=1 // pred_region
      _
    $region9: #{affine_forward.1} parent=1 // pred_fallthru
      _
    // Predicated region
    $region10: #{affine_forward.1} parent=1 // pred_check
      _
    $region11: #{affine_forward.1} parent=1 // pred_check_branch
      %14 = sbr.rel (0) target = $region13
    $region12: #{affine_forward.1} parent=1 // pred_region
      _
    $region13: #{affine_forward.1} parent=1 // pred_fallthru
      _
    %v16 = vld [vmem:[%s0] sm:$0xff]
    %v17 = vld [vmem:[%s0 + $0x8] sm:$0xff]
    %v18 = vpack.c.bf16 %v17, %v16
    %v19 = vld [vmem:[%s1] sm:$0xf]
    %v20 = vld [vmem:[%s1 + $0x4] sm:$0xf]
    %v21 = vld [vmem:[%s1 + $0x8] sm:$0xf]
    %v22 = vld [vmem:[%s1 + $0xc] sm:$0xf]
    %v23 = vld [vmem:[%s1 + $0x10] sm:$0xf]
    %v24 = vld [vmem:[%s1 + $0x14] sm:$0xf]
    %v25 = vld [vmem:[%s1 + $0x18] sm:$0xf]
    %v26 = vld [vmem:[%s1 + $0x1c] sm:$0xf]
    %v27 = vld [vmem:[%s1 + $0x20] sm:$0xf]
    %v28 = vld [vmem:[%s1 + $0x24] sm:$0xf]
    %v29 = vld [vmem:[%s1 + $0x28] sm:$0xf]
    %v30 = vld [vmem:[%s1 + $0x2c] sm:$0xf]
    %v31 = vld [vmem:[%s1 + $0x30] sm:$0xf]
    %v32 = vld [vmem:[%s1 + $0x34] sm:$0xf]
    %v33 = vld [vmem:[%s1 + $0x38] sm:$0xf]
    %v34 = vld [vmem:[%s1 + $0x3c] sm:$0xf]
    %v35 = vld [vmem:[%s2] sm:$0x1]
    %v37 = vlaneseq
    %v38 = vshrl.u32 %v37, 7
    %v39 = vsub.s32 0, %v38
    %v40 = vrot.slane %v35, %v39
    %v58 = vunpack.c.l.b16 %v19
    %v59 = vunpack.c.l.b16 %v20
    %v60 = vunpack.c.l.b16 %v21
    %v61 = vunpack.c.l.b16 %v22
    %v62 = vunpack.c.l.b16 %v23
    %v63 = vunpack.c.l.b16 %v24
    %v64 = vunpack.c.l.b16 %v25
    %v65 = vunpack.c.l.b16 %v26
    %v66 = vunpack.c.l.b16 %v27
    %v67 = vunpack.c.l.b16 %v28
    %v68 = vunpack.c.l.b16 %v29
    %v69 = vunpack.c.l.b16 %v30
    %v70 = vunpack.c.l.b16 %v31
    %v71 = vunpack.c.l.b16 %v32
    %v72 = vunpack.c.l.b16 %v33
    %v73 = vunpack.c.l.b16 %v34
    %v74 = vpack.c.b16 %v59, %v58
    %v75 = vpack.c.b16 %v61, %v60
    %v76 = vpack.c.b16 %v63, %v62
    %v77 = vpack.c.b16 %v65, %v64
    %v78 = vpack.c.b16 %v67, %v66
    %v79 = vpack.c.b16 %v69, %v68
    %v80 = vpack.c.b16 %v71, %v70
    %v81 = vpack.c.b16 %v73, %v72
    %90 = vmatprep.subr.bf16.mxu0 0
    %91 = vmatpush1.bf16.msra.mxu0 %v74
    %92 = vmatprep.subr.bf16.mxu0 0
    %93 = vmatpush1.bf16.msra.mxu0 %v75
    %94 = vmatprep.subr.bf16.mxu0 0
    %95 = vmatpush1.bf16.msra.mxu0 %v76
    %96 = vmatprep.subr.bf16.mxu0 0
    %97 = vmatpush1.bf16.msra.mxu0 %v77
    %98 = vmatprep.subr.bf16.mxu0 0
    %99 = vmatpush1.bf16.msra.mxu0 %v78
    %100 = vmatprep.subr.bf16.mxu0 0
    %101 = vmatpush1.bf16.msra.mxu0 %v79
    %102 = vmatprep.subr.bf16.mxu0 0
    %103 = vmatpush1.bf16.msra.mxu0 %v80
    %104 = vmatprep.subr.bf16.mxu0 0
    %105 = vmatpush1.bf16.msra.mxu0 %v81
    %106 = vmatprep.subr.bf16.mxu0 0
    %107 = vmatpush1.bf16.msra.mxu0 0
    %108 = vmatprep.subr.bf16.mxu0 0
    %109 = vmatpush1.bf16.msra.mxu0 0
    %110 = vmatprep.subr.bf16.mxu0 0
    %111 = vmatpush1.bf16.msra.mxu0 0
    %112 = vmatprep.subr.bf16.mxu0 0
    %113 = vmatpush1.bf16.msra.mxu0 0
    %114 = vmatprep.subr.bf16.mxu0 0
    %115 = vmatpush1.bf16.msra.mxu0 0
    %116 = vmatprep.subr.bf16.mxu0 0
    %117 = vmatpush1.bf16.msra.mxu0 0
    %118 = vmatprep.subr.bf16.mxu0 0
    %119 = vmatpush1.bf16.msra.mxu0 0
    %120 = vmatprep.subr.bf16.mxu0 0
    %121 = vmatpush1.bf16.msra.mxu0 0
    %122 = vmatprep.mubr.bf16.mxu0 0
    %123 = vmatmul.mubr.bf16.gmra.mrb[0].mxu0 %v18
    %v124 = vpop.f32.mrb[0].mxu0
    %v125 = vadd.f32 %v40, %v124
    %v126 = vpop.f32.mrb[0].mxu0
    %v127 = vpop.f32.mrb[0].mxu0
    %v128 = vadd.f32 %v40, %v127
    %v129 = vpop.f32.mrb[0].mxu0
    %130 = vdwg.mxu0
    %131 = vst [vmem:[#allocation2] sm:$0xff] %v125
    %132 = vst [vmem:[#allocation2 + $0x8] sm:$0xff] %v128
    // Predicated region
    $region14: #{affine_forward.1} parent=1 // pred_check
      _
    $region15: #{affine_forward.1} parent=1 // pred_check_branch
      %134 = sbr.rel (0) target = $region17
    $region16: #{affine_forward.1} parent=1 // pred_region
      %s136 = ssub.s32 256, 256
      %137 = vsyncadd [#allocation3], %s136
      %s138 = sshll.u32 [#allocation2], 4
      %s139 = int_to_ptr.vmem [resolvable:$true] %s138
      %144 = dma.vmem_to_hbm [thread:$0]  %s139, 256, %s3, [#allocation3], 128, 128, 8
    $region17: #{affine_forward.1} parent=1 // pred_fallthru
      _
    // Predicated region
    $region18: #{affine_forward.1} parent=1 // pred_check
      _
    $region19: #{affine_forward.1} parent=1 // pred_check_branch
      %146 = sbr.rel (0) target = $region21
    $region20: #{affine_forward.1} parent=1 // pred_region
      %147 = dma.done [#allocation3], 256
    $region21: #{affine_forward.1} parent=1 // pred_fallthru
      _
    %148 = vsyncpa [#allocation3], 1

</llo_original>
